<compile_context>
chip_gen: v5e
topology: v5e:2x2
jax: 0.10.0
libtpu: 0.0.40
codegen_flags: <defaults>
</compile_context>

<pallas_src>
import numpy as np
import jax
import jax.numpy as jnp
from jax.experimental import pallas as pl
from jax.experimental.pallas import tpu as pltpu

# --- "config" constants (deterministic, in-script) ---------------------------
B = 2                  # config.B
Nt = 16
Na = 4
Lin = 8
M = Nt // Na           # 4
L = Na * Lin           # 32
N = L * M              # 128  (lane-dense)
P0 = 0.9
PS = 0.1
TOL = 1e-9
THETA = float(np.log(P0 / PS))
MAX_LOG = float(np.log(np.finfo(np.float32).max))   # ~88.72

# Padding values chosen so padded rows contribute der == 0 exactly:
#   a = THETA + (1 - 2*1e4) / 1.0  ~ -2e4  -> exp underflows to 0 -> der = 0.
PAD_R = 1.0e4
PAD_COV = 1.0


def _shrink_ook_kernel(r_ref, cov_ref, exp_ref, psum_ref):
    r = r_ref[...].astype(jnp.float32)
    cov = cov_ref[...].astype(jnp.float32)

    # One reciprocal of cov, reused twice (replaces two f32 divides).
    inv_cov = pl.reciprocal(cov, approx=False)

    a = THETA + (1.0 - 2.0 * r) * inv_cov
    # regularize_exp: a[a >= log(finfo.max)] = log(finfo.max) - 1
    a = jnp.where(a >= MAX_LOG, MAX_LOG - 1.0, a)

    eta = jnp.exp(a)
    e = pl.reciprocal(1.0 + eta + TOL, approx=False)
    der = 2.0 * eta * e * e * inv_cov
    # Keep full nan_to_num semantics (nan->0, +/-inf -> finite max) to match
    # torch.nan_to_num(nan=0.0) defaults when cov -> 0.
    der = jnp.nan_to_num(der, nan=0.0)

    exp_ref[...] = e
    # Per-block, per-lane partial sum (sublane reduce only); the cross-lane /
    # cross-block reduce happens once in the wrapper.
    psum_ref[...] = jnp.sum(der, axis=0, keepdims=True)


def _plan_tiling(b: int, n: int, max_block_bytes: int):
    """Pick (rows_per_block, padded_rows). Block sized by bytes, rows mult of 8."""
    max_rows = max(8, (max_block_bytes // (n * 4)) // 8 * 8)
    b8 = ((b + 7) // 8) * 8
    if b8 <= max_rows:
        return b8, b8
    num_blocks = -(-b8 // max_rows)                  # ceil
    tb = ((-(-b8 // num_blocks)) + 7) // 8 * 8       # ceil rows/block, to mult of 8
    return tb, tb * num_blocks


def _shrink_ook_xla(r2, cov2):
    """Small-shape fast path: one XLA fusion, no kernel launch overhead."""
    a = THETA + (1.0 - 2.0 * r2) / cov2
    a = jnp.where(a >= MAX_LOG, MAX_LOG - 1.0, a)
    eta = jnp.exp(a)
    e = 1.0 / (1.0 + eta + TOL)
    der = jnp.nan_to_num(2.0 * eta * e * e / cov2, nan=0.0)
    return e, jnp.mean(der)


def shrink_ook(r, cov, *, max_block_bytes=2 * 1024 * 1024, allow_fast_path=True):
    """r, cov: (B, N, 1) float32. Returns (exp: (B, N, 1) f32, dxdr: scalar f32)."""
    b, n, _ = r.shape
    r2 = r.reshape(b, n).astype(jnp.float32)
    cov2 = cov.reshape(b, n).astype(jnp.float32)

    # Degenerate / tiny shapes: launch + DMA setup dominates -> fused XLA path.
    if allow_fast_path and b * n <= 1024:
        e, dxdr = _shrink_ook_xla(r2, cov2)
        return e.reshape(b, n, 1), dxdr

    tb, b_pad = _plan_tiling(b, n, max_block_bytes)
    if b_pad != b:
        pad = b_pad - b
        r2 = jnp.concatenate(
            [r2, jnp.full((pad, n), PAD_R, dtype=jnp.float32)], axis=0)
        cov2 = jnp.concatenate(
            [cov2, jnp.full((pad, n), PAD_COV, dtype=jnp.float32)], axis=0)

    num_blocks = b_pad // tb

    exp_pad, partials = pl.pallas_call(
        _shrink_ook_kernel,
        out_shape=(
            jax.ShapeDtypeStruct((b_pad, n), jnp.float32),
            jax.ShapeDtypeStruct((num_blocks, n), jnp.float32),
        ),
        grid=(num_blocks,),
        in_specs=[
            pl.BlockSpec((tb, n), lambda i: (i, 0)),
            pl.BlockSpec((tb, n), lambda i: (i, 0)),
        ],
        out_specs=(
            pl.BlockSpec((tb, n), lambda i: (i, 0)),
            pl.BlockSpec((1, n), lambda i: (i, 0)),
        ),
        compiler_params=pltpu.CompilerParams(
            # Grid steps are fully independent (per-block partial sums), so the
            # axis is parallel -> both TensorCores on v7x.
            dimension_semantics=("parallel",),
            # ~12.6 MiB double-buffered working set at the default block size;
            # raise above v5e's 16 MiB scoped default, below physical everywhere.
            vmem_limit_bytes=32 * 1024 * 1024,
        ),
    )(r2, cov2)

    # Padded rows contribute exactly 0 to the sum; normalize by the true count.
    dxdr = jnp.sum(partials) * (1.0 / (b * n))
    return exp_pad[:b].reshape(b, n, 1), dxdr


def shrink_ook_ref(r, cov):
    theta = np.log(P0 / PS)
    a = theta + (1.0 - 2.0 * r) / cov
    a = np.where(a >= MAX_LOG, MAX_LOG - 1.0, a)
    eta = np.exp(a)
    e = 1.0 / (1.0 + eta + TOL)
    der = np.nan_to_num(2.0 * eta * e * e / cov, nan=0.0)
    return e.astype(np.float32), np.float32(der.mean())


if __name__ == "__main__":
    key = jax.random.PRNGKey(0)

    def make_inputs(k, b):
        k1, k2 = jax.random.split(k)
        r = jax.random.normal(k1, (b, N, 1), dtype=jnp.float32)
        cov = jax.random.uniform(k2, (b, N, 1), dtype=jnp.float32,
                                 minval=0.1, maxval=1.0)
        return r, cov

    k_a, k_c = jax.random.split(key)

    # Case 1: module-config shape (B=2, N=128), forced through the Pallas path
    # (single padded (8,128) block).
    r_a, cov_a = make_inputs(k_a, B)
    exp_a, dx_a = shrink_ook(r_a, cov_a, allow_fast_path=False)
    exp_a = jax.block_until_ready(exp_a)
    dx_a = jax.block_until_ready(dx_a)
    e_ref, d_ref = shrink_ook_ref(np.asarray(r_a), np.asarray(cov_a))
    np.testing.assert_allclose(np.asarray(exp_a), e_ref, rtol=1e-5, atol=1e-6)
    np.testing.assert_allclose(float(dx_a), float(d_ref), rtol=1e-5, atol=1e-6)

    # Case 2: same inputs via the small-shape XLA fast path.
    exp_b, dx_b = shrink_ook(r_a, cov_a)
    exp_b = jax.block_until_ready(exp_b)
    dx_b = jax.block_until_ready(dx_b)
    np.testing.assert_allclose(np.asarray(exp_b), e_ref, rtol=1e-5, atol=1e-6)
    np.testing.assert_allclose(float(dx_b), float(d_ref), rtol=1e-5, atol=1e-6)

    # Case 3: ragged batch (601 rows, not a multiple of 8) with a small block
    # cap so the padded, multi-block, "parallel" grid path is exercised.
    r_c, cov_c = make_inputs(k_c, 601)
    exp_c, dx_c = shrink_ook(r_c, cov_c, max_block_bytes=256 * N * 4)
    exp_c = jax.block_until_ready(exp_c)
    dx_c = jax.block_until_ready(dx_c)
    e_ref_c, d_ref_c = shrink_ook_ref(np.asarray(r_c), np.asarray(cov_c))
    np.testing.assert_allclose(np.asarray(exp_c), e_ref_c, rtol=1e-5, atol=1e-6)
    np.testing.assert_allclose(float(dx_c), float(d_ref_c), rtol=1e-5, atol=1e-6)

    # TODO(synk): only the shrinkOOK branch is implemented; bayes/shrink/lasso
    # branches of the module are selected by constructor arg and not needed here.
    print("KERNEL_OK")
</pallas_src>

<mosaic_0001>
module attributes {stable_mosaic.version = 11 : i64} {
  func.func @_shrink_ook_kernel(%arg0: i32, %arg1: memref<8x128xf32, #tpu.memory_space<vmem>>, %arg2: memref<8x128xf32, #tpu.memory_space<vmem>>, %arg3: memref<8x128xf32, #tpu.memory_space<vmem>>, %arg4: memref<1x128xf32, #tpu.memory_space<vmem>>) attributes {dimension_semantics = [#tpu.dimension_semantics<parallel>], iteration_bounds = array<i64: 1>, scalar_prefetch = 0 : i64, scratch_operands = 0 : i64, tpu.core_type = #tpu.core_type<tc>, window_params = [{transform_indices = @transform_0, window_bounds = array<i64: 8, 128>}, {transform_indices = @transform_1, window_bounds = array<i64: 8, 128>}, {transform_indices = @transform_2, window_bounds = array<i64: 8, 128>}, {transform_indices = @transform_3, window_bounds = array<i64: 1, 128>}]} {
    %c0 = arith.constant 0 : index
    %c0_0 = arith.constant 0 : index
    %0 = vector.load %arg1[%c0, %c0_0] : memref<8x128xf32, #tpu.memory_space<vmem>>, vector<8x128xf32>
    %c0_1 = arith.constant 0 : index
    %c0_2 = arith.constant 0 : index
    %1 = vector.load %arg2[%c0_1, %c0_2] : memref<8x128xf32, #tpu.memory_space<vmem>>, vector<8x128xf32>
    %2 = tpu.reciprocal %1 : vector<8x128xf32> -> vector<8x128xf32>
    %cst = arith.constant 2.000000e+00 : f32
    %3 = vector.broadcast %cst : f32 to vector<8x128xf32>
    %4 = arith.mulf %3, %0 : vector<8x128xf32>
    %cst_3 = arith.constant 1.000000e+00 : f32
    %5 = vector.broadcast %cst_3 : f32 to vector<8x128xf32>
    %6 = arith.subf %5, %4 : vector<8x128xf32>
    %7 = arith.mulf %6, %2 : vector<8x128xf32>
    %cst_4 = arith.constant 2.19722462 : f32
    %8 = vector.broadcast %cst_4 : f32 to vector<8x128xf32>
    %9 = arith.addf %8, %7 : vector<8x128xf32>
    %cst_5 = arith.constant 88.7228394 : f32
    %10 = vector.broadcast %cst_5 : f32 to vector<8x128xf32>
    %11 = arith.cmpf oge, %9, %10 : vector<8x128xf32>
    %cst_6 = arith.constant 87.7228394 : f32
    %12 = vector.broadcast %cst_6 : f32 to vector<8x128xf32>
    %13 = arith.select %11, %12, %9 : vector<8x128xi1>, vector<8x128xf32>
    %14 = math.exp %13 : vector<8x128xf32>
    %cst_7 = arith.constant 1.000000e+00 : f32
    %15 = vector.broadcast %cst_7 : f32 to vector<8x128xf32>
    %16 = arith.addf %15, %14 : vector<8x128xf32>
    %cst_8 = arith.constant 9.99999971E-10 : f32
    %17 = vector.broadcast %cst_8 : f32 to vector<8x128xf32>
    %18 = arith.addf %16, %17 : vector<8x128xf32>
    %19 = tpu.reciprocal %18 : vector<8x128xf32> -> vector<8x128xf32>
    %cst_9 = arith.constant 2.000000e+00 : f32
    %20 = vector.broadcast %cst_9 : f32 to vector<8x128xf32>
    %21 = arith.mulf %20, %14 : vector<8x128xf32>
    %22 = arith.mulf %21, %19 : vector<8x128xf32>
    %23 = arith.mulf %22, %19 : vector<8x128xf32>
    %24 = arith.mulf %23, %2 : vector<8x128xf32>
    %cst_10 = arith.constant 0.000000e+00 : f32
    %25 = arith.cmpf one, %24, %24 : vector<8x128xf32>
    %26 = vector.broadcast %cst_10 : f32 to vector<8x128xf32>
    %27 = arith.select %25, %26, %24 : vector<8x128xi1>, vector<8x128xf32>
    %cst_11 = arith.constant 0x7F800000 : f32
    %28 = vector.broadcast %cst_11 : f32 to vector<8x128xf32>
    %29 = arith.cmpf oeq, %27, %28 : vector<8x128xf32>
    %cst_12 = arith.constant 3.40282347E+38 : f32
    %30 = vector.broadcast %cst_12 : f32 to vector<8x128xf32>
    %31 = arith.select %29, %30, %27 : vector<8x128xi1>, vector<8x128xf32>
    %cst_13 = arith.constant 0xFF800000 : f32
    %32 = vector.broadcast %cst_13 : f32 to vector<8x128xf32>
    %33 = arith.cmpf oeq, %31, %32 : vector<8x128xf32>
    %cst_14 = arith.constant -3.40282347E+38 : f32
    %34 = vector.broadcast %cst_14 : f32 to vector<8x128xf32>
    %35 = arith.select %33, %34, %31 : vector<8x128xi1>, vector<8x128xf32>
    %c0_15 = arith.constant 0 : index
    %c0_16 = arith.constant 0 : index
    %36 = vector.load %arg3[%c0_15, %c0_16] : memref<8x128xf32, #tpu.memory_space<vmem>>, vector<8x128xf32>
    tpu.vector_store %arg3[%c0_15, %c0_16], %19 {strides = array<i32>} : memref<8x128xf32, #tpu.memory_space<vmem>>, vector<8x128xf32>,
    %cst_17 = arith.constant dense<0.000000e+00> : vector<128xf32>
    %37 = vector.multi_reduction <add>, %35, %cst_17 [0] : vector<8x128xf32> to vector<128xf32>
    %38 = vector.shape_cast %37 : vector<128xf32> to vector<1x128xf32>
    %c0_18 = arith.constant 0 : index
    %c0_19 = arith.constant 0 : index
    %39 = vector.load %arg4[%c0_18, %c0_19] : memref<1x128xf32, #tpu.memory_space<vmem>>, vector<1x128xf32>
    tpu.vector_store %arg4[%c0_18, %c0_19], %38 {strides = array<i32>} : memref<1x128xf32, #tpu.memory_space<vmem>>, vector<1x128xf32>,
    return
  }
  func.func @transform_0(%arg0: i32) -> (i32, i32) {
    %c0_i32 = arith.constant 0 : i32
    %c0_i32_0 = arith.constant 0 : i32
    return %arg0, %c0_i32 : i32, i32
  }
  func.func @transform_1(%arg0: i32) -> (i32, i32) {
    %c0_i32 = arith.constant 0 : i32
    %c0_i32_0 = arith.constant 0 : i32
    return %arg0, %c0_i32 : i32, i32
  }
  func.func @transform_2(%arg0: i32) -> (i32, i32) {
    %c0_i32 = arith.constant 0 : i32
    %c0_i32_0 = arith.constant 0 : i32
    return %arg0, %c0_i32 : i32, i32
  }
  func.func @transform_3(%arg0: i32) -> (i32, i32) {
    %c0_i32 = arith.constant 0 : i32
    %c0_i32_0 = arith.constant 0 : i32
    return %arg0, %c0_i32 : i32, i32
  }
}

</mosaic_0001>

<llo_original>
// kernel: tpu_custom_call.1
$region0: #{tpu_custom_call.1}
  #allocation0 [shape = 'u32[]', space=smem, size = 0x4, offset = 0x4, fixed_abs, tag = 'smem constant byte address 0x4 - core index']
  #allocation1 [shape = 'u32[72,128]{1,0:T(1,128)}', space=vmem, size = 0x9000, scoped, tag = 'internal scratch']
  %s0 = inlined_call_operand.hbm [shape: f32[8,128], index: 0, kind: input, shape index: {}]
  %s1 = inlined_call_operand.hbm [shape: f32[8,128], index: 1, kind: input, shape index: {}]
  %s2 = inlined_call_operand.hbm [shape: f32[8,128], index: 2, kind: output, shape index: {0}]
  %s3 = inlined_call_operand.hbm [shape: f32[1,128], index: 3, kind: output, shape index: {1}]
  %4 = xla_tuple %s2, %s3
  %s5 = sld [smem:[#allocation0]]
  $region34: #{tpu_custom_call.1} parent=0
    _
  %s7 = ssub.s32 1, %s5
  %s8 = scalar_select 0, %s7, %s5
  $region1: #{tpu_custom_call.1} parent=0
    #allocation2 [shape = 'u8[4096]{0}', space=vmem, size = 0x1000, scoped, tag = 'input window, operand 0, single buffered']
    #allocation3 [shape = 's32[1]{0}', space=sflag, size = 0x4, scoped, tag = 'scoped memory for tpu_custom_call.1']
    #allocation4 [shape = 's32[1]{0}', space=sflag, size = 0x4, scoped, tag = 'scoped memory for tpu_custom_call.1']
    #allocation5 [shape = 'u8[4096]{0}', space=vmem, size = 0x1000, scoped, tag = 'input window, operand 1, single buffered']
    #allocation6 [shape = 's32[1]{0}', space=sflag, size = 0x4, scoped, tag = 'scoped memory for tpu_custom_call.1']
    #allocation7 [shape = 'u8[4096]{0}', space=vmem, size = 0x1000, scoped, tag = 'output window, operand 0, single buffered']
    #allocation8 [shape = 'u8[512]{0}', space=vmem, size = 0x400, scoped, tag = 'output window, operand 1, single buffered']
    #allocation9 [shape = 's32[1]{0}', space=sflag, size = 0x4, scoped, tag = 'scoped memory for tpu_custom_call.1']
    %9 = vsyncpa [#allocation3], 0
    %10 = vsyncpa [#allocation6], 0
    %11 = vsyncpa [#allocation4], 0
    %12 = vsyncpa [#allocation9], 0
    // Predicated region
    $region2: #{tpu_custom_call.1} parent=1 // pred_check
      _
    $region3: #{tpu_custom_call.1} parent=1 // pred_check_branch
      %14 = sbr.rel (0) target = $region5
    $region4: #{tpu_custom_call.1} parent=1 // pred_region
      %16 = vsyncadd [#allocation3], 0
      %s18 = sshll.u32 %s0, 4
      %s19 = int_to_ptr.hbm [resolvable:$true] %s18
      %s20 = sshll.u32 [#allocation2], 4
      %s21 = int_to_ptr.vmem [resolvable:$true] %s20
      %23 = dma.hbm_to_vmem [thread:$0]  %s19, 128, %s21, [#allocation3]
    $region5: #{tpu_custom_call.1} parent=1 // pred_fallthru
      _
    // Predicated region
    $region6: #{tpu_custom_call.1} parent=1 // pred_check
      _
    $region7: #{tpu_custom_call.1} parent=1 // pred_check_branch
      %25 = sbr.rel (0) target = $region9
    $region8: #{tpu_custom_call.1} parent=1 // pred_region
      %27 = vsyncadd [#allocation6], 0
      %s29 = sshll.u32 %s1, 4
      %s30 = int_to_ptr.hbm [resolvable:$true] %s29
      %s31 = sshll.u32 [#allocation5], 4
      %s32 = int_to_ptr.vmem [resolvable:$true] %s31
      %34 = dma.hbm_to_vmem [thread:$0]  %s30, 128, %s32, [#allocation6]
    $region9: #{tpu_custom_call.1} parent=1 // pred_fallthru
      _
    // Predicated region
    $region10: #{tpu_custom_call.1} parent=1 // pred_check
      _
    $region11: #{tpu_custom_call.1} parent=1 // pred_check_branch
      %36 = sbr.rel (0) target = $region13
    $region12: #{tpu_custom_call.1} parent=1 // pred_region
      %38 = dma.done [#allocation3], 128
    $region13: #{tpu_custom_call.1} parent=1 // pred_fallthru
      _
    // Predicated region
    $region14: #{tpu_custom_call.1} parent=1 // pred_check
      _
    $region15: #{tpu_custom_call.1} parent=1 // pred_check_branch
      %40 = sbr.rel (0) target = $region17
    $region16: #{tpu_custom_call.1} parent=1 // pred_region
      %42 = dma.done [#allocation6], 128
    $region17: #{tpu_custom_call.1} parent=1 // pred_fallthru
      _
    %v43 = vld [vmem:[#allocation2] sm:$0xff]
    %v44 = vld [vmem:[#allocation5] sm:$0xff]
    %v45 = vrcp.pop %v44
    %v46 = vmul.f32 %v44, %v45
    %v47 = vsub.f32 1.0, %v46
    %v48 = vmul.f32 %v45, %v47
    %v49 = vadd.f32 %v45, %v48
    %vm50 = vweird.f32 %v44
    %vm51 = vweird.f32 %v45
    %vm52 = vmor %vm50, %vm51
    %v53 = vsel %vm52, %v45, %v49
    %v54 = vand.u32 2147483647, %v44
    %vm55 = vcmp.eq.f32.partialorder %v54, 8.507059e+37
    %v56 = vand.u32 %v44, 2147483648
    %v57 = vor.u32 1.1754944e-38, %v56
    %v58 = vsel %vm55, %v57, %v53
    %v59 = vmul.f32 %v43, 2.0
    %v60 = vsub.f32 1.0, %v59
    %v61 = vmul.f32 %v60, %v58
    %v62 = vadd.f32 %v61, 2.1972246
    %vm63 = vcmp.ge.f32.partialorder %v62, 88.72284
    %v64 = vsel %vm63, 87.72284, %v62
    %v65 = vmul.f32 %v64, 1.442695
    %v66 = vpow.pop %v65
    %v67 = vadd.f32 %v66, 1.0
    %v68 = vadd.f32 %v67, 1e-09
    %v69 = vrcp.pop %v68
    %v70 = vmul.f32 %v68, %v69
    %v71 = vsub.f32 1.0, %v70
    %v72 = vmul.f32 %v69, %v71
    %v73 = vadd.f32 %v69, %v72
    %vm74 = vweird.f32 %v68
    %vm75 = vweird.f32 %v69
    %vm76 = vmor %vm74, %vm75
    %v77 = vsel %vm76, %v69, %v73
    %v78 = vand.u32 2147483647, %v68
    %vm79 = vcmp.eq.f32.partialorder %v78, 8.507059e+37
    %v80 = vand.u32 %v68, 2147483648
    %v81 = vor.u32 1.1754944e-38, %v80
    %v82 = vsel %vm79, %v81, %v77
    %v83 = vmul.f32 %v66, 2.0
    %v84 = vmul.f32 %v83, %v82
    %v85 = vmul.f32 %v84, %v82
    %v86 = vmul.f32 %v85, %v58
    %vm87 = vcmp.ne.f32.partialorder %v86, %v86
    %v88 = vsel %vm87, 0.0, %v86
    %vm89 = vcmp.eq.f32.partialorder %v88, inf
    %v90 = vsel %vm89, 3.4028235e+38, %v88
    %vm91 = vcmp.eq.f32.partialorder %v90, -inf
    %v92 = vsel %vm91, -3.4028235e+38, %v90
    %93 = vst [vmem:[#allocation7] sm:$0xff] %v82
    %v94 = vrot.slane %v92, 4
    %v95 = vadd.f32 %v92, %v94
    %v96 = vrot.slane %v95, 2
    %v97 = vadd.f32 %v95, %v96
    %v98 = vrot.slane %v97, 1
    %v99 = vadd.f32 %v97, %v98
    %100 = vst [vmem:[#allocation8] sm:$0x1] %v99
    // Predicated region
    $region18: #{tpu_custom_call.1} parent=1 // pred_check
      _
    $region19: #{tpu_custom_call.1} parent=1 // pred_check_branch
      %102 = sbr.rel (0) target = $region21
    $region20: #{tpu_custom_call.1} parent=1 // pred_region
      %104 = vsyncadd [#allocation4], 0
      %s106 = sshll.u32 [#allocation7], 4
      %s107 = int_to_ptr.vmem [resolvable:$true] %s106
      %s108 = sshll.u32 %s2, 4
      %s109 = int_to_ptr.hbm [resolvable:$true] %s108
      %111 = dma.vmem_to_hbm [thread:$0]  %s107, 128, %s109, [#allocation4]
    $region21: #{tpu_custom_call.1} parent=1 // pred_fallthru
      _
    // Predicated region
    $region22: #{tpu_custom_call.1} parent=1 // pred_check
      _
    $region23: #{tpu_custom_call.1} parent=1 // pred_check_branch
      %113 = sbr.rel (0) target = $region25
    $region24: #{tpu_custom_call.1} parent=1 // pred_region
      %115 = vsyncadd [#allocation9], 0
      %s117 = sshll.u32 [#allocation8], 4
      %s118 = int_to_ptr.vmem [resolvable:$true] %s117
      %s119 = sshll.u32 %s3, 4
      %s120 = int_to_ptr.hbm [resolvable:$true] %s119
      %122 = dma.vmem_to_hbm [thread:$0]  %s118, 16, %s120, [#allocation9]
    $region25: #{tpu_custom_call.1} parent=1 // pred_fallthru
      _
    // Predicated region
    $region26: #{tpu_custom_call.1} parent=1 // pred_check
      _
    $region27: #{tpu_custom_call.1} parent=1 // pred_check_branch
      %124 = sbr.rel (0) target = $region29
    $region28: #{tpu_custom_call.1} parent=1 // pred_region
      %126 = dma.done [#allocation4], 128
    $region29: #{tpu_custom_call.1} parent=1 // pred_fallthru
      _
    // Predicated region
    $region30: #{tpu_custom_call.1} parent=1 // pred_check
      _
    $region31: #{tpu_custom_call.1} parent=1 // pred_check_branch
      %128 = sbr.rel (0) target = $region33
    $region32: #{tpu_custom_call.1} parent=1 // pred_region
      %130 = dma.done [#allocation9], 16
    $region33: #{tpu_custom_call.1} parent=1 // pred_fallthru
      _
    %131 = vsyncpa [#allocation3], 1
    %132 = vsyncpa [#allocation6], 1
    %133 = vsyncpa [#allocation4], 1
    %134 = vsyncpa [#allocation9], 1

</llo_original>
